<compile_context>
chip_gen: v7x
topology: tpu7x:2x2x1
jax: 0.10.0
libtpu: 0.0.40
codegen_flags: <defaults>
</compile_context>

<pallas_src>
import jax
import jax.numpy as jnp
import numpy as np
from jax.experimental import pallas as pl
from jax.experimental.pallas import tpu as pltpu


# ----------------------------- hyper-params ---------------------------------
N_BLOCKS = 4
D_IN = 16
D_HIDDEN_BK = [32, 32]
D_HIDDEN_FC = [64, 32]
D_OUT = 8
BN_EPS = 1e-5

LANE = 128                        # padded feature width for every layer
SLAB_ROWS = 5 * LANE + 8          # 5 padded weight matrices + (8,128) bias slab


def _round_up(x, m):
    return (x + m - 1) // m * m


# ----------------------------- parameter setup -------------------------------
def fold_bn(gamma, beta, mean, var, eps=BN_EPS):
    """Fold eval-mode BatchNorm1d into per-feature scale/shift."""
    scale = gamma / jnp.sqrt(var + eps)
    shift = beta - mean * scale
    return scale, shift


def make_params(key):
    """Deterministic synthetic parameters matching the module's shapes."""
    keys = iter(jax.random.split(key, 256))

    def layer(d_in, d_out, stacked=None):
        lead = (stacked,) if stacked is not None else ()
        w = 0.1 * jax.random.normal(next(keys), lead + (d_in, d_out), jnp.float32)
        b = 0.1 * jax.random.normal(next(keys), lead + (1, d_out), jnp.float32)
        gamma = 1.0 + 0.1 * jax.random.normal(next(keys), lead + (1, d_out), jnp.float32)
        beta = 0.1 * jax.random.normal(next(keys), lead + (1, d_out), jnp.float32)
        mean = 0.1 * jax.random.normal(next(keys), lead + (1, d_out), jnp.float32)
        var = 1.0 + 0.1 * jnp.abs(jax.random.normal(next(keys), lead + (1, d_out), jnp.float32))
        s, t = fold_bn(gamma, beta, mean, var)
        return w, b, s, t

    # per-band block layers: one independent Linear per band, stacked on axis 0
    block_params = []
    d_in = D_IN
    for d_h in D_HIDDEN_BK:
        block_params.append(layer(d_in, d_h, stacked=N_BLOCKS))
        d_in = d_h

    # FC hidden layers
    fc_hidden = []
    d_in = N_BLOCKS * D_HIDDEN_BK[-1]
    for d_h in D_HIDDEN_FC:
        fc_hidden.append(layer(d_in, d_h))
        d_in = d_h

    # final Linear (no ReLU / BN)
    w_out = 0.1 * jax.random.normal(next(keys), (d_in, D_OUT), jnp.float32)
    b_out = 0.1 * jax.random.normal(next(keys), (1, D_OUT), jnp.float32)
    return block_params, fc_hidden, w_out, b_out


def _block_diag_stack(w):
    """(NB, d_in, d_out) stacked band weights -> (NB*d_in, NB*d_out) block diag."""
    nb, di, do = w.shape
    out = jnp.zeros((nb * di, nb * do), w.dtype)
    for b in range(nb):
        out = out.at[b * di:(b + 1) * di, b * do:(b + 1) * do].set(w[b])
    return out


def pack_params(block_params, fc_hidden, w_out, b_out):
    """Host-side packing: block-diag band weights, forward BN folding, and
    zero-padding of every layer to 128 lanes.  Returns ONE (648, 128) slab:

        rows   0..127  W1   (padded block-diag band layer 1, 64x128 -> 128x128)
        rows 128..255  W2   (block-diag band layer 2, BN1 folded)
        rows 256..383  WF1  (FC hidden 1, BN2 folded, 128x64 -> 128x128)
        rows 384..511  WF2  (FC hidden 2, BN-FC1 folded, 64x32 -> 128x128)
        rows 512..639  WO   (output Linear, BN-FC2 folded, 32x8 -> 128x128)
        rows 640..647  bias slab (rows 0..4 = layer biases, padded lanes zero)
    """
    (w1, b1, s1, t1), (w2, b2, s2, t2) = block_params
    (wf1, bf1, sf1, tf1), (wf2, bf2, sf2, tf2) = fc_hidden

    # --- band stage, layer 1 (block diagonal) ---
    W1 = _block_diag_stack(w1)                       # (64, 128)
    B1 = b1.reshape(1, -1)                           # (1, 128), band-major
    S1 = s1.reshape(1, -1)
    T1 = t1.reshape(1, -1)

    # --- band stage, layer 2: fold BN1 (post-ReLU affine) into its weights ---
    W2 = _block_diag_stack(w2)                       # (128, 128)
    B2 = b2.reshape(1, -1)
    S2 = s2.reshape(1, -1)
    T2 = t2.reshape(1, -1)
    W2f = S1.T * W2
    B2f = B2 + T1 @ W2

    # --- FC hidden 1: fold BN2 (band-major concat order matches blockdiag) ---
    WF1 = S2.T * wf1                                 # (128, 64)
    BF1 = bf1 + T2 @ wf1

    # --- FC hidden 2: fold BN of FC hidden 1 ---
    WF2 = sf1.T * wf2                                # (64, 32)
    BF2 = bf2 + tf1 @ wf2

    # --- output Linear: fold BN of FC hidden 2 ---
    WO = sf2.T * w_out                               # (32, 8)
    BO = b_out + tf2 @ w_out

    def pad_mat(w):
        r, c = w.shape
        return jnp.pad(w, ((0, LANE - r), (0, LANE - c)))

    def pad_vec(v):
        return jnp.pad(v, ((0, 0), (0, LANE - v.shape[1])))

    biases = jnp.concatenate(
        [pad_vec(B1), pad_vec(B2f), pad_vec(BF1), pad_vec(BF2), pad_vec(BO),
         jnp.zeros((3, LANE), jnp.float32)], axis=0)          # (8, 128)

    slab = jnp.concatenate(
        [pad_mat(W1), pad_mat(W2f), pad_mat(WF1), pad_mat(WF2), pad_mat(WO),
         biases], axis=0).astype(jnp.float32)                 # (648, 128)
    assert slab.shape == (SLAB_ROWS, LANE)
    return slab


# ----------------------------- fused Pallas kernel ----------------------------
def _kernel(x_ref, w_ref, o_ref):
    w1 = w_ref[0:128, :]
    w2 = w_ref[128:256, :]
    wf1 = w_ref[256:384, :]
    wf2 = w_ref[384:512, :]
    wo = w_ref[512:640, :]
    b = w_ref[640:648, :]

    h = jnp.dot(x_ref[...], w1, preferred_element_type=jnp.float32)
    h = jnp.maximum(h + b[0:1, :], 0.0)
    h = jnp.dot(h, w2, preferred_element_type=jnp.float32)
    h = jnp.maximum(h + b[1:2, :], 0.0)         # band-major concat feature map
    h = jnp.dot(h, wf1, preferred_element_type=jnp.float32)
    h = jnp.maximum(h + b[2:3, :], 0.0)
    h = jnp.dot(h, wf2, preferred_element_type=jnp.float32)
    h = jnp.maximum(h + b[3:4, :], 0.0)
    o_ref[...] = jnp.dot(h, wo, preferred_element_type=jnp.float32) + b[4:5, :]


def inverse_nn_forward(x_flat, slab, *, tile_m=256):
    """Fused forward pass.

    x_flat : (BATCH, N_BLOCKS * D_IN)  band-major input.
    slab   : (648, 128) packed parameter slab from pack_params().
    returns: (BATCH, D_OUT)
    """
    batch, d_in_flat = x_flat.shape
    assert d_in_flat == N_BLOCKS * D_IN

    tm = min(tile_m, _round_up(max(batch, 8), 8))
    padded = _round_up(batch, tm)

    # lane-dense, tile-padded input: (padded, 128)
    x_pad = jnp.pad(x_flat.astype(jnp.float32),
                    ((0, padded - batch), (0, LANE - d_in_flat)))

    out = pl.pallas_call(
        _kernel,
        out_shape=jax.ShapeDtypeStruct((padded, LANE), jnp.float32),
        grid=(padded // tm,),
        in_specs=[
            pl.BlockSpec((tm, LANE), lambda i: (i, 0)),           # x tile
            pl.BlockSpec((SLAB_ROWS, LANE), lambda i: (0, 0)),    # resident params
        ],
        out_specs=pl.BlockSpec((tm, LANE), lambda i: (i, 0)),
        compiler_params=pltpu.CompilerParams(
            dimension_semantics=("parallel",)),                   # v7x: 2 TCs
    )(x_pad, slab)

    return out[:batch, :D_OUT]


# ----------------------------- plain-JAX reference ----------------------------
def reference_forward(x_bands, block_params, fc_hidden, w_out, b_out):
    """Unfolded reference: per-band Linear->ReLU->BN(eval), concat, FC, Linear."""
    outs = []
    for nb in range(N_BLOCKS):
        h = x_bands[nb]
        for (w, b, s, t) in block_params:
            h = jnp.maximum(h @ w[nb] + b[nb], 0.0) * s[nb] + t[nb]
        outs.append(h)
    feat = jnp.concatenate(outs, axis=1)
    h = feat
    for (w, b, s, t) in fc_hidden:
        h = jnp.maximum(h @ w + b, 0.0) * s + t
    return h @ w_out + b_out


def _check(data, slab, block_params, fc_hidden, w_out, b_out):
    out = jax.block_until_ready(inverse_nn_forward(data, slab))
    x_bands = jnp.transpose(data.reshape(data.shape[0], N_BLOCKS, D_IN), (1, 0, 2))
    ref = reference_forward(x_bands, block_params, fc_hidden, w_out, b_out)
    np.testing.assert_allclose(np.asarray(out), np.asarray(ref),
                               rtol=1e-4, atol=1e-4)
    assert out.shape == (data.shape[0], D_OUT)


if __name__ == "__main__":
    key = jax.random.PRNGKey(0)
    k_x0, k_x1, k_p = jax.random.split(key, 3)

    block_params, fc_hidden, w_out, b_out = make_params(k_p)
    slab = pack_params(block_params, fc_hidden, w_out, b_out)

    # small single-tile case (grid=(1,), tm=8)
    data_small = jax.random.normal(k_x0, (8, N_BLOCKS * D_IN), jnp.float32)
    _check(data_small, slab, block_params, fc_hidden, w_out, b_out)

    # batched case (384 rows -> padded to 512, grid=(2,), tm=256, parallel axis)
    data_big = jax.random.normal(k_x1, (384, N_BLOCKS * D_IN), jnp.float32)
    _check(data_big, slab, block_params, fc_hidden, w_out, b_out)

    print("KERNEL_OK")
</pallas_src>

<mosaic_0001>
module attributes {stable_mosaic.version = 11 : i64} {
  func.func @_kernel(%arg0: i32, %arg1: memref<8x128xf32, #tpu.memory_space<vmem>>, %arg2: memref<648x128xf32, #tpu.memory_space<vmem>>, %arg3: memref<8x128xf32, #tpu.memory_space<vmem>>) attributes {dimension_semantics = [#tpu.dimension_semantics<parallel>], iteration_bounds = array<i64: 1>, scalar_prefetch = 0 : i64, scratch_operands = 0 : i64, tpu.core_type = #tpu.core_type<tc>, window_params = [{transform_indices = @transform_0, window_bounds = array<i64: 8, 128>}, {pipeline_mode = #tpu.pipeline_mode<synchronous>, transform_indices = @transform_1, window_bounds = array<i64: 648, 128>}, {transform_indices = @transform_2, window_bounds = array<i64: 8, 128>}]} {
    %c0 = arith.constant 0 : index
    %c0_0 = arith.constant 0 : index
    %0 = vector.load %arg2[%c0, %c0_0] : memref<648x128xf32, #tpu.memory_space<vmem>>, vector<128x128xf32>
    %c128 = arith.constant 128 : index
    %c0_1 = arith.constant 0 : index
    %1 = vector.load %arg2[%c128, %c0_1] : memref<648x128xf32, #tpu.memory_space<vmem>>, vector<128x128xf32>
    %c256 = arith.constant 256 : index
    %c0_2 = arith.constant 0 : index
    %2 = vector.load %arg2[%c256, %c0_2] : memref<648x128xf32, #tpu.memory_space<vmem>>, vector<128x128xf32>
    %c384 = arith.constant 384 : index
    %c0_3 = arith.constant 0 : index
    %3 = vector.load %arg2[%c384, %c0_3] : memref<648x128xf32, #tpu.memory_space<vmem>>, vector<128x128xf32>
    %c512 = arith.constant 512 : index
    %c0_4 = arith.constant 0 : index
    %4 = vector.load %arg2[%c512, %c0_4] : memref<648x128xf32, #tpu.memory_space<vmem>>, vector<128x128xf32>
    %c640 = arith.constant 640 : index
    %c0_5 = arith.constant 0 : index
    %5 = vector.load %arg2[%c640, %c0_5] : memref<648x128xf32, #tpu.memory_space<vmem>>, vector<8x128xf32>
    %c0_6 = arith.constant 0 : index
    %c0_7 = arith.constant 0 : index
    %6 = vector.load %arg1[%c0_6, %c0_7] : memref<8x128xf32, #tpu.memory_space<vmem>>, vector<8x128xf32>
    %cst = arith.constant dense<0.000000e+00> : vector<8x128xf32>
    %7 = tpu.matmul %6, %0, %cst {dimension_numbers = #tpu.dot_dimension_numbers<[1], [0], [0], [1], [0, 0, 1, 1], [], []>} : vector<8x128xf32>, vector<128x128xf32>, vector<8x128xf32> -> vector<8x128xf32>
    %8 = vector.extract_strided_slice %5 {offsets = [0, 0], sizes = [1, 128], strides = [1, 1]} : vector<8x128xf32> to vector<1x128xf32>
    %9 = vector.broadcast %8 : vector<1x128xf32> to vector<8x128xf32>
    %10 = arith.addf %7, %9 : vector<8x128xf32>
    %cst_8 = arith.constant 0.000000e+00 : f32
    %11 = vector.broadcast %cst_8 : f32 to vector<8x128xf32>
    %12 = arith.maximumf %10, %11 : vector<8x128xf32>
    %cst_9 = arith.constant dense<0.000000e+00> : vector<8x128xf32>
    %13 = tpu.matmul %12, %1, %cst_9 {dimension_numbers = #tpu.dot_dimension_numbers<[1], [0], [0], [1], [0, 0, 1, 1], [], []>} : vector<8x128xf32>, vector<128x128xf32>, vector<8x128xf32> -> vector<8x128xf32>
    %14 = vector.extract_strided_slice %5 {offsets = [1, 0], sizes = [1, 128], strides = [1, 1]} : vector<8x128xf32> to vector<1x128xf32>
    %15 = vector.broadcast %14 : vector<1x128xf32> to vector<8x128xf32>
    %16 = arith.addf %13, %15 : vector<8x128xf32>
    %cst_10 = arith.constant 0.000000e+00 : f32
    %17 = vector.broadcast %cst_10 : f32 to vector<8x128xf32>
    %18 = arith.maximumf %16, %17 : vector<8x128xf32>
    %cst_11 = arith.constant dense<0.000000e+00> : vector<8x128xf32>
    %19 = tpu.matmul %18, %2, %cst_11 {dimension_numbers = #tpu.dot_dimension_numbers<[1], [0], [0], [1], [0, 0, 1, 1], [], []>} : vector<8x128xf32>, vector<128x128xf32>, vector<8x128xf32> -> vector<8x128xf32>
    %20 = vector.extract_strided_slice %5 {offsets = [2, 0], sizes = [1, 128], strides = [1, 1]} : vector<8x128xf32> to vector<1x128xf32>
    %21 = vector.broadcast %20 : vector<1x128xf32> to vector<8x128xf32>
    %22 = arith.addf %19, %21 : vector<8x128xf32>
    %cst_12 = arith.constant 0.000000e+00 : f32
    %23 = vector.broadcast %cst_12 : f32 to vector<8x128xf32>
    %24 = arith.maximumf %22, %23 : vector<8x128xf32>
    %cst_13 = arith.constant dense<0.000000e+00> : vector<8x128xf32>
    %25 = tpu.matmul %24, %3, %cst_13 {dimension_numbers = #tpu.dot_dimension_numbers<[1], [0], [0], [1], [0, 0, 1, 1], [], []>} : vector<8x128xf32>, vector<128x128xf32>, vector<8x128xf32> -> vector<8x128xf32>
    %26 = vector.extract_strided_slice %5 {offsets = [3, 0], sizes = [1, 128], strides = [1, 1]} : vector<8x128xf32> to vector<1x128xf32>
    %27 = vector.broadcast %26 : vector<1x128xf32> to vector<8x128xf32>
    %28 = arith.addf %25, %27 : vector<8x128xf32>
    %cst_14 = arith.constant 0.000000e+00 : f32
    %29 = vector.broadcast %cst_14 : f32 to vector<8x128xf32>
    %30 = arith.maximumf %28, %29 : vector<8x128xf32>
    %cst_15 = arith.constant dense<0.000000e+00> : vector<8x128xf32>
    %31 = tpu.matmul %30, %4, %cst_15 {dimension_numbers = #tpu.dot_dimension_numbers<[1], [0], [0], [1], [0, 0, 1, 1], [], []>} : vector<8x128xf32>, vector<128x128xf32>, vector<8x128xf32> -> vector<8x128xf32>
    %32 = vector.extract_strided_slice %5 {offsets = [4, 0], sizes = [1, 128], strides = [1, 1]} : vector<8x128xf32> to vector<1x128xf32>
    %33 = vector.broadcast %32 : vector<1x128xf32> to vector<8x128xf32>
    %34 = arith.addf %31, %33 : vector<8x128xf32>
    %c0_16 = arith.constant 0 : index
    %c0_17 = arith.constant 0 : index
    %35 = vector.load %arg3[%c0_16, %c0_17] : memref<8x128xf32, #tpu.memory_space<vmem>>, vector<8x128xf32>
    tpu.vector_store %arg3[%c0_16, %c0_17], %34 {strides = array<i32>} : memref<8x128xf32, #tpu.memory_space<vmem>>, vector<8x128xf32>,
    return
  }
  func.func @transform_0(%arg0: i32) -> (i32, i32) {
    %c0_i32 = arith.constant 0 : i32
    %c0_i32_0 = arith.constant 0 : i32
    return %arg0, %c0_i32 : i32, i32
  }
  func.func @transform_1(%arg0: i32) -> (i32, i32) {
    %c0_i32 = arith.constant 0 : i32
    %c0_i32_0 = arith.constant 0 : i32
    %c0_i32_1 = arith.constant 0 : i32
    return %c0_i32, %c0_i32_0 : i32, i32
  }
  func.func @transform_2(%arg0: i32) -> (i32, i32) {
    %c0_i32 = arith.constant 0 : i32
    %c0_i32_0 = arith.constant 0 : i32
    return %arg0, %c0_i32 : i32, i32
  }
}

</mosaic_0001>

<llo_original>
// kernel: tpu_custom_call.1
$region0: #{tpu_custom_call.1}
  #allocation0 [shape = 'u32[]', space=smem, size = 0x4, offset = 0x4, fixed_abs, tag = 'smem constant byte address 0x4 - core index']
  #allocation1 [shape = 'u32[144,128]{1,0:T(1,128)}', space=vmem, size = 0x12000, scoped, tag = 'internal scratch']
  %s0 = inlined_call_operand.hbm [shape: f32[8,128], index: 0, kind: input, shape index: {}]
  %s1 = inlined_call_operand.hbm [shape: f32[648,128], index: 1, kind: input, shape index: {}]
  %s2 = inlined_call_operand.hbm [shape: f32[8,128], index: 2, kind: output, shape index: {}]
  %s3 = sld [smem:[#allocation0]]
  $region26: #{tpu_custom_call.1} parent=0
    _
  %s5 = ssub.s32 1, %s3
  %s6 = scalar_select 0, %s5, %s3
  $region1: #{tpu_custom_call.1} parent=0
    #allocation2 [shape = 'u8[4096]{0}', space=vmem, size = 0x1000, scoped, tag = 'input window, operand 0, single buffered']
    #allocation3 [shape = 's32[1]{0}', space=sflag, size = 0x4, scoped, tag = 'scoped memory for tpu_custom_call.1']
    #allocation4 [shape = 's32[1]{0}', space=sflag, size = 0x4, scoped, tag = 'scoped memory for tpu_custom_call.1']
    #allocation5 [shape = 'u8[331776]{0}', space=vmem, size = 0x51000, scoped, tag = 'input window, operand 1, single buffered']
    #allocation6 [shape = 's32[1]{0}', space=sflag, size = 0x4, scoped, tag = 'scoped memory for tpu_custom_call.1']
    #allocation7 [shape = 'u8[4096]{0}', space=vmem, size = 0x1000, scoped, tag = 'output window, operand 0, single buffered']
    %7 = vsyncpa [#allocation3], 0
    %8 = vsyncpa [#allocation6], 0
    %9 = vsyncpa [#allocation4], 0
    // Predicated region
    $region2: #{tpu_custom_call.1} parent=1 // pred_check
      _
    $region3: #{tpu_custom_call.1} parent=1 // pred_check_branch
      %11 = sbr.rel (0) target = $region5
    $region4: #{tpu_custom_call.1} parent=1 // pred_region
      %s13 = ssub.s32 128, 128
      %14 = vsyncadd [#allocation3], %s13
      %s16 = sshll.u32 [#allocation2], 4
      %s17 = int_to_ptr.vmem [resolvable:$true] %s16
      %19 = dma.hbm_to_vmem [thread:$0]  %s0, 128, %s17, [#allocation3]
    $region5: #{tpu_custom_call.1} parent=1 // pred_fallthru
      _
    // Predicated region
    $region6: #{tpu_custom_call.1} parent=1 // pred_check
      _
    $region7: #{tpu_custom_call.1} parent=1 // pred_check_branch
      %21 = sbr.rel (0) target = $region9
    $region8: #{tpu_custom_call.1} parent=1 // pred_region
      %s23 = ssub.s32 10368, 10368
      %24 = vsyncadd [#allocation6], %s23
      %s25 = sshll.u32 [#allocation5], 4
      %s26 = int_to_ptr.vmem [resolvable:$true] %s25
      %31 = dma.hbm_to_vmem [thread:$0]  %s1, 10368, %s26, [#allocation6], 128, 128, 8
    $region9: #{tpu_custom_call.1} parent=1 // pred_fallthru
      _
    // Predicated region
    $region10: #{tpu_custom_call.1} parent=1 // pred_check
      _
    $region11: #{tpu_custom_call.1} parent=1 // pred_check_branch
      %33 = sbr.rel (0) target = $region13
    $region12: #{tpu_custom_call.1} parent=1 // pred_region
      %34 = dma.done [#allocation3], 128
    $region13: #{tpu_custom_call.1} parent=1 // pred_fallthru
      _
    // Predicated region
    $region14: #{tpu_custom_call.1} parent=1 // pred_check
      _
    $region15: #{tpu_custom_call.1} parent=1 // pred_check_branch
      %36 = sbr.rel (0) target = $region17
    $region16: #{tpu_custom_call.1} parent=1 // pred_region
      %37 = dma.done [#allocation6], 10368
    $region17: #{tpu_custom_call.1} parent=1 // pred_fallthru
      _
    %v38 = vld [vmem:[#allocation5] sm:$0xff]
    %v39 = vld [vmem:[#allocation5 + $0x8] sm:$0xff]
    %v40 = vld [vmem:[#allocation5 + $0x10] sm:$0xff]
    %v41 = vld [vmem:[#allocation5 + $0x18] sm:$0xff]
    %v42 = vld [vmem:[#allocation5 + $0x20] sm:$0xff]
    %v43 = vld [vmem:[#allocation5 + $0x28] sm:$0xff]
    %v44 = vld [vmem:[#allocation5 + $0x30] sm:$0xff]
    %v45 = vld [vmem:[#allocation5 + $0x38] sm:$0xff]
    %v46 = vld [vmem:[#allocation5 + $0x40] sm:$0xff]
    %v47 = vld [vmem:[#allocation5 + $0x48] sm:$0xff]
    %v48 = vld [vmem:[#allocation5 + $0x50] sm:$0xff]
    %v49 = vld [vmem:[#allocation5 + $0x58] sm:$0xff]
    %v50 = vld [vmem:[#allocation5 + $0x60] sm:$0xff]
    %v51 = vld [vmem:[#allocation5 + $0x68] sm:$0xff]
    %v52 = vld [vmem:[#allocation5 + $0x70] sm:$0xff]
    %v53 = vld [vmem:[#allocation5 + $0x78] sm:$0xff]
    %v54 = vld [vmem:[#allocation5 + $0x80] sm:$0xff]
    %v55 = vld [vmem:[#allocation5 + $0x88] sm:$0xff]
    %v56 = vld [vmem:[#allocation5 + $0x90] sm:$0xff]
    %v57 = vld [vmem:[#allocation5 + $0x98] sm:$0xff]
    %v58 = vld [vmem:[#allocation5 + $0xa0] sm:$0xff]
    %v59 = vld [vmem:[#allocation5 + $0xa8] sm:$0xff]
    %v60 = vld [vmem:[#allocation5 + $0xb0] sm:$0xff]
    %v61 = vld [vmem:[#allocation5 + $0xb8] sm:$0xff]
    %v62 = vld [vmem:[#allocation5 + $0xc0] sm:$0xff]
    %v63 = vld [vmem:[#allocation5 + $0xc8] sm:$0xff]
    %v64 = vld [vmem:[#allocation5 + $0xd0] sm:$0xff]
    %v65 = vld [vmem:[#allocation5 + $0xd8] sm:$0xff]
    %v66 = vld [vmem:[#allocation5 + $0xe0] sm:$0xff]
    %v67 = vld [vmem:[#allocation5 + $0xe8] sm:$0xff]
    %v68 = vld [vmem:[#allocation5 + $0xf0] sm:$0xff]
    %v69 = vld [vmem:[#allocation5 + $0xf8] sm:$0xff]
    %v70 = vld [vmem:[#allocation5 + $0x100] sm:$0xff]
    %v71 = vld [vmem:[#allocation5 + $0x108] sm:$0xff]
    %v72 = vld [vmem:[#allocation5 + $0x110] sm:$0xff]
    %v73 = vld [vmem:[#allocation5 + $0x118] sm:$0xff]
    %v74 = vld [vmem:[#allocation5 + $0x120] sm:$0xff]
    %v75 = vld [vmem:[#allocation5 + $0x128] sm:$0xff]
    %v76 = vld [vmem:[#allocation5 + $0x130] sm:$0xff]
    %v77 = vld [vmem:[#allocation5 + $0x138] sm:$0xff]
    %v78 = vld [vmem:[#allocation5 + $0x140] sm:$0xff]
    %v79 = vld [vmem:[#allocation5 + $0x148] sm:$0xff]
    %v80 = vld [vmem:[#allocation5 + $0x150] sm:$0xff]
    %v81 = vld [vmem:[#allocation5 + $0x158] sm:$0xff]
    %v82 = vld [vmem:[#allocation5 + $0x160] sm:$0xff]
    %v83 = vld [vmem:[#allocation5 + $0x168] sm:$0xff]
    %v84 = vld [vmem:[#allocation5 + $0x170] sm:$0xff]
    %v85 = vld [vmem:[#allocation5 + $0x178] sm:$0xff]
    %v86 = vld [vmem:[#allocation5 + $0x180] sm:$0xff]
    %v87 = vld [vmem:[#allocation5 + $0x188] sm:$0xff]
    %v88 = vld [vmem:[#allocation5 + $0x190] sm:$0xff]
    %v89 = vld [vmem:[#allocation5 + $0x198] sm:$0xff]
    %v90 = vld [vmem:[#allocation5 + $0x1a0] sm:$0xff]
    %v91 = vld [vmem:[#allocation5 + $0x1a8] sm:$0xff]
    %v92 = vld [vmem:[#allocation5 + $0x1b0] sm:$0xff]
    %v93 = vld [vmem:[#allocation5 + $0x1b8] sm:$0xff]
    %v94 = vld [vmem:[#allocation5 + $0x1c0] sm:$0xff]
    %v95 = vld [vmem:[#allocation5 + $0x1c8] sm:$0xff]
    %v96 = vld [vmem:[#allocation5 + $0x1d0] sm:$0xff]
    %v97 = vld [vmem:[#allocation5 + $0x1d8] sm:$0xff]
    %v98 = vld [vmem:[#allocation5 + $0x1e0] sm:$0xff]
    %v99 = vld [vmem:[#allocation5 + $0x1e8] sm:$0xff]
    %v100 = vld [vmem:[#allocation5 + $0x1f0] sm:$0xff]
    %v101 = vld [vmem:[#allocation5 + $0x1f8] sm:$0xff]
    %v102 = vld [vmem:[#allocation5 + $0x200] sm:$0xff]
    %v103 = vld [vmem:[#allocation5 + $0x208] sm:$0xff]
    %v104 = vld [vmem:[#allocation5 + $0x210] sm:$0xff]
    %v105 = vld [vmem:[#allocation5 + $0x218] sm:$0xff]
    %v106 = vld [vmem:[#allocation5 + $0x220] sm:$0xff]
    %v107 = vld [vmem:[#allocation5 + $0x228] sm:$0xff]
    %v108 = vld [vmem:[#allocation5 + $0x230] sm:$0xff]
    %v109 = vld [vmem:[#allocation5 + $0x238] sm:$0xff]
    %v110 = vld [vmem:[#allocation5 + $0x240] sm:$0xff]
    %v111 = vld [vmem:[#allocation5 + $0x248] sm:$0xff]
    %v112 = vld [vmem:[#allocation5 + $0x250] sm:$0xff]
    %v113 = vld [vmem:[#allocation5 + $0x258] sm:$0xff]
    %v114 = vld [vmem:[#allocation5 + $0x260] sm:$0xff]
    %v115 = vld [vmem:[#allocation5 + $0x268] sm:$0xff]
    %v116 = vld [vmem:[#allocation5 + $0x270] sm:$0xff]
    %v117 = vld [vmem:[#allocation5 + $0x278] sm:$0xff]
    %v118 = vld [vmem:[#allocation5 + $0x280] sm:$0xff]
    %v119 = vld [vmem:[#allocation2] sm:$0xff]
    %v120 = vlaneseq
    %v121 = vshrl.u32 %v120, 7
    %v122 = vsub.s32 0, %v121
    %v123 = vrot.slane %v118, %v122
    %124 = vmatprep.subr.mxu0 0.0
    %125 = vmatpush1.msra.mxu0 %v38
    %126 = vmatprep.subr.mxu0 0.0
    %127 = vmatpush1.msra.mxu0 %v39
    %128 = vmatprep.subr.mxu0 0.0
    %129 = vmatpush1.msra.mxu0 %v40
    %130 = vmatprep.subr.mxu0 0.0
    %131 = vmatpush1.msra.mxu0 %v41
    %132 = vmatprep.subr.mxu0 0.0
    %133 = vmatpush1.msra.mxu0 %v42
    %134 = vmatprep.subr.mxu0 0.0
    %135 = vmatpush1.msra.mxu0 %v43
    %136 = vmatprep.subr.mxu0 0.0
    %137 = vmatpush1.msra.mxu0 %v44
    %138 = vmatprep.subr.mxu0 0.0
    %139 = vmatpush1.msra.mxu0 %v45
    %140 = vmatprep.subr.mxu0 0.0
    %141 = vmatpush1.msra.mxu0 %v46
    %142 = vmatprep.subr.mxu0 0.0
    %143 = vmatpush1.msra.mxu0 %v47
    %144 = vmatprep.subr.mxu0 0.0
    %145 = vmatpush1.msra.mxu0 %v48
    %146 = vmatprep.subr.mxu0 0.0
    %147 = vmatpush1.msra.mxu0 %v49
    %148 = vmatprep.subr.mxu0 0.0
    %149 = vmatpush1.msra.mxu0 %v50
    %150 = vmatprep.subr.mxu0 0.0
    %151 = vmatpush1.msra.mxu0 %v51
    %152 = vmatprep.subr.mxu0 0.0
    %153 = vmatpush1.msra.mxu0 %v52
    %154 = vmatprep.subr.mxu0 0.0
    %155 = vmatpush1.msra.mxu0 %v53
    %156 = vmatprep.subr.mxu0 0.0
    %157 = vmatpush1.msra.mxu0 0.0
    %158 = vmatprep.subr.mxu0 0.0
    %159 = vmatpush1.msra.mxu0 0.0
    %160 = vmatprep.subr.mxu0 0.0
    %161 = vmatpush1.msra.mxu0 0.0
    %162 = vmatprep.subr.mxu0 0.0
    %163 = vmatpush1.msra.mxu0 0.0
    %164 = vmatprep.subr.mxu0 0.0
    %165 = vmatpush1.msra.mxu0 0.0
    %166 = vmatprep.subr.mxu0 0.0
    %167 = vmatpush1.msra.mxu0 0.0
    %168 = vmatprep.subr.mxu0 0.0
    %169 = vmatpush1.msra.mxu0 0.0
    %170 = vmatprep.subr.mxu0 0.0
    %171 = vmatpush1.msra.mxu0 0.0
    %172 = vmatprep.subr.mxu0 0.0
    %173 = vmatpush1.msra.mxu0 0.0
    %174 = vmatprep.subr.mxu0 0.0
    %175 = vmatpush1.msra.mxu0 0.0
    %176 = vmatprep.subr.mxu0 0.0
    %177 = vmatpush1.msra.mxu0 0.0
    %178 = vmatprep.subr.mxu0 0.0
    %179 = vmatpush1.msra.mxu0 0.0
    %180 = vmatprep.subr.mxu0 0.0
    %181 = vmatpush1.msra.mxu0 0.0
    %182 = vmatprep.subr.mxu0 0.0
    %183 = vmatpush1.msra.mxu0 0.0
    %184 = vmatprep.subr.mxu0 0.0
    %185 = vmatpush1.msra.mxu0 0.0
    %186 = vmatprep.subr.mxu0 0.0
    %187 = vmatpush1.msra.mxu0 0.0
    %188 = vmatprep.mubr.f32.mxu0 0.0
    %189 = vmatmul.mubr.f32.gmra.mrb[0].mxu0 %v119
    %v190 = vpop.f32.mrb[0].mxu0
    %v191 = vadd.f32 %v123, %v190
    %v192 = vpop.f32.mrb[0].mxu0
    %193 = vdwg.mxu0
    %v194 = vmax.f32 %v191, 0.0
    %v195 = vlaneseq
    %v196 = vshrl.u32 %v195, 7
    %v197 = vsub.s32 1, %v196
    %v198 = vrot.slane %v118, %v197
    %199 = vmatprep.subr.mxu0 0.0
    %200 = vmatpush1.msra.mxu0 %v54
    %201 = vmatprep.subr.mxu0 0.0
    %202 = vmatpush1.msra.mxu0 %v55
    %203 = vmatprep.subr.mxu0 0.0
    %204 = vmatpush1.msra.mxu0 %v56
    %205 = vmatprep.subr.mxu0 0.0
    %206 = vmatpush1.msra.mxu0 %v57
    %207 = vmatprep.subr.mxu0 0.0
    %208 = vmatpush1.msra.mxu0 %v58
    %209 = vmatprep.subr.mxu0 0.0
    %210 = vmatpush1.msra.mxu0 %v59
    %211 = vmatprep.subr.mxu0 0.0
    %212 = vmatpush1.msra.mxu0 %v60
    %213 = vmatprep.subr.mxu0 0.0
    %214 = vmatpush1.msra.mxu0 %v61
    %215 = vmatprep.subr.mxu0 0.0
    %216 = vmatpush1.msra.mxu0 %v62
    %217 = vmatprep.subr.mxu0 0.0
    %218 = vmatpush1.msra.mxu0 %v63
    %219 = vmatprep.subr.mxu0 0.0
    %220 = vmatpush1.msra.mxu0 %v64
    %221 = vmatprep.subr.mxu0 0.0
    %222 = vmatpush1.msra.mxu0 %v65
    %223 = vmatprep.subr.mxu0 0.0
    %224 = vmatpush1.msra.mxu0 %v66
    %225 = vmatprep.subr.mxu0 0.0
    %226 = vmatpush1.msra.mxu0 %v67
    %227 = vmatprep.subr.mxu0 0.0
    %228 = vmatpush1.msra.mxu0 %v68
    %229 = vmatprep.subr.mxu0 0.0
    %230 = vmatpush1.msra.mxu0 %v69
    %231 = vmatprep.subr.mxu0 0.0
    %232 = vmatpush1.msra.mxu0 0.0
    %233 = vmatprep.subr.mxu0 0.0
    %234 = vmatpush1.msra.mxu0 0.0
    %235 = vmatprep.subr.mxu0 0.0
    %236 = vmatpush1.msra.mxu0 0.0
    %237 = vmatprep.subr.mxu0 0.0
    %238 = vmatpush1.msra.mxu0 0.0
    %239 = vmatprep.subr.mxu0 0.0
    %240 = vmatpush1.msra.mxu0 0.0
    %241 = vmatprep.subr.mxu0 0.0
    %242 = vmatpush1.msra.mxu0 0.0
    %243 = vmatprep.subr.mxu0 0.0
    %244 = vmatpush1.msra.mxu0 0.0
    %245 = vmatprep.subr.mxu0 0.0
    %246 = vmatpush1.msra.mxu0 0.0
    %247 = vmatprep.subr.mxu0 0.0
    %248 = vmatpush1.msra.mxu0 0.0
    %249 = vmatprep.subr.mxu0 0.0
    %250 = vmatpush1.msra.mxu0 0.0
    %251 = vmatprep.subr.mxu0 0.0
    %252 = vmatpush1.msra.mxu0 0.0
    %253 = vmatprep.subr.mxu0 0.0
    %254 = vmatpush1.msra.mxu0 0.0
    %255 = vmatprep.subr.mxu0 0.0
    %256 = vmatpush1.msra.mxu0 0.0
    %257 = vmatprep.subr.mxu0 0.0
    %258 = vmatpush1.msra.mxu0 0.0
    %259 = vmatprep.subr.mxu0 0.0
    %260 = vmatpush1.msra.mxu0 0.0
    %261 = vmatprep.subr.mxu0 0.0
    %262 = vmatpush1.msra.mxu0 0.0
    %263 = vmatprep.mubr.f32.mxu0 0.0
    %264 = vmatmul.mubr.f32.gmra.mrb[0].mxu0 %v194
    %v265 = vpop.f32.mrb[0].mxu0
    %v266 = vadd.f32 %v198, %v265
    %v267 = vpop.f32.mrb[0].mxu0
    %268 = vdwg.mxu0
    %v269 = vmax.f32 %v266, 0.0
    %v270 = vlaneseq
    %v271 = vshrl.u32 %v270, 7
    %v272 = vsub.s32 2, %v271
    %v273 = vrot.slane %v118, %v272
    %274 = vmatprep.subr.mxu0 0.0
    %275 = vmatpush1.msra.mxu0 %v70
    %276 = vmatprep.subr.mxu0 0.0
    %277 = vmatpush1.msra.mxu0 %v71
    %278 = vmatprep.subr.mxu0 0.0
    %279 = vmatpush1.msra.mxu0 %v72
    %280 = vmatprep.subr.mxu0 0.0
    %281 = vmatpush1.msra.mxu0 %v73
    %282 = vmatprep.subr.mxu0 0.0
    %283 = vmatpush1.msra.mxu0 %v74
    %284 = vmatprep.subr.mxu0 0.0
    %285 = vmatpush1.msra.mxu0 %v75
    %286 = vmatprep.subr.mxu0 0.0
    %287 = vmatpush1.msra.mxu0 %v76
    %288 = vmatprep.subr.mxu0 0.0
    %289 = vmatpush1.msra.mxu0 %v77
    %290 = vmatprep.subr.mxu0 0.0
    %291 = vmatpush1.msra.mxu0 %v78
    %292 = vmatprep.subr.mxu0 0.0
    %293 = vmatpush1.msra.mxu0 %v79
    %294 = vmatprep.subr.mxu0 0.0
    %295 = vmatpush1.msra.mxu0 %v80
    %296 = vmatprep.subr.mxu0 0.0
    %297 = vmatpush1.msra.mxu0 %v81
    %298 = vmatprep.subr.mxu0 0.0
    %299 = vmatpush1.msra.mxu0 %v82
    %300 = vmatprep.subr.mxu0 0.0
    %301 = vmatpush1.msra.mxu0 %v83
    %302 = vmatprep.subr.mxu0 0.0
    %303 = vmatpush1.msra.mxu0 %v84
    %304 = vmatprep.subr.mxu0 0.0
    %305 = vmatpush1.msra.mxu0 %v85
    %306 = vmatprep.subr.mxu0 0.0
    %307 = vmatpush1.msra.mxu0 0.0
    %308 = vmatprep.subr.mxu0 0.0
    %309 = vmatpush1.msra.mxu0 0.0
    %310 = vmatprep.subr.mxu0 0.0
    %311 = vmatpush1.msra.mxu0 0.0
    %312 = vmatprep.subr.mxu0 0.0
    %313 = vmatpush1.msra.mxu0 0.0
    %314 = vmatprep.subr.mxu0 0.0
    %315 = vmatpush1.msra.mxu0 0.0
    %316 = vmatprep.subr.mxu0 0.0
    %317 = vmatpush1.msra.mxu0 0.0
    %318 = vmatprep.subr.mxu0 0.0
    %319 = vmatpush1.msra.mxu0 0.0
    %320 = vmatprep.subr.mxu0 0.0
    %321 = vmatpush1.msra.mxu0 0.0
    %322 = vmatprep.subr.mxu0 0.0
    %323 = vmatpush1.msra.mxu0 0.0
    %324 = vmatprep.subr.mxu0 0.0
    %325 = vmatpush1.msra.mxu0 0.0
    %326 = vmatprep.subr.mxu0 0.0
    %327 = vmatpush1.msra.mxu0 0.0
    %328 = vmatprep.subr.mxu0 0.0
    %329 = vmatpush1.msra.mxu0 0.0
    %330 = vmatprep.subr.mxu0 0.0
    %331 = vmatpush1.msra.mxu0 0.0
    %332 = vmatprep.subr.mxu0 0.0
    %333 = vmatpush1.msra.mxu0 0.0
    %334 = vmatprep.subr.mxu0 0.0
    %335 = vmatpush1.msra.mxu0 0.0
    %336 = vmatprep.subr.mxu0 0.0
    %337 = vmatpush1.msra.mxu0 0.0
    %338 = vmatprep.mubr.f32.mxu0 0.0
    %339 = vmatmul.mubr.f32.gmra.mrb[0].mxu0 %v269
    %v340 = vpop.f32.mrb[0].mxu0
    %v341 = vadd.f32 %v273, %v340
    %v342 = vpop.f32.mrb[0].mxu0
    %343 = vdwg.mxu0
    %v344 = vmax.f32 %v341, 0.0
    %v345 = vlaneseq
    %v346 = vshrl.u32 %v345, 7
    %v347 = vsub.s32 3, %v346
    %v348 = vrot.slane %v118, %v347
    %349 = vmatprep.subr.mxu0 0.0
    %350 = vmatpush1.msra.mxu0 %v86
    %351 = vmatprep.subr.mxu0 0.0
    %352 = vmatpush1.msra.mxu0 %v87
    %353 = vmatprep.subr.mxu0 0.0
    %354 = vmatpush1.msra.mxu0 %v88
    %355 = vmatprep.subr.mxu0 0.0
    %356 = vmatpush1.msra.mxu0 %v89
    %357 = vmatprep.subr.mxu0 0.0
    %358 = vmatpush1.msra.mxu0 %v90
    %359 = vmatprep.subr.mxu0 0.0
    %360 = vmatpush1.msra.mxu0 %v91
    %361 = vmatprep.subr.mxu0 0.0
    %362 = vmatpush1.msra.mxu0 %v92
    %363 = vmatprep.subr.mxu0 0.0
    %364 = vmatpush1.msra.mxu0 %v93
    %365 = vmatprep.subr.mxu0 0.0
    %366 = vmatpush1.msra.mxu0 %v94
    %367 = vmatprep.subr.mxu0 0.0
    %368 = vmatpush1.msra.mxu0 %v95
    %369 = vmatprep.subr.mxu0 0.0
    %370 = vmatpush1.msra.mxu0 %v96
    %371 = vmatprep.subr.mxu0 0.0
    %372 = vmatpush1.msra.mxu0 %v97
    %373 = vmatprep.subr.mxu0 0.0
    %374 = vmatpush1.msra.mxu0 %v98
    %375 = vmatprep.subr.mxu0 0.0
    %376 = vmatpush1.msra.mxu0 %v99
    %377 = vmatprep.subr.mxu0 0.0
    %378 = vmatpush1.msra.mxu0 %v100
    %379 = vmatprep.subr.mxu0 0.0
    %380 = vmatpush1.msra.mxu0 %v101
    %381 = vmatprep.subr.mxu0 0.0
    %382 = vmatpush1.msra.mxu0 0.0
    %383 = vmatprep.subr.mxu0 0.0
    %384 = vmatpush1.msra.mxu0 0.0
    %385 = vmatprep.subr.mxu0 0.0
    %386 = vmatpush1.msra.mxu0 0.0
    %387 = vmatprep.subr.mxu0 0.0
    %388 = vmatpush1.msra.mxu0 0.0
    %389 = vmatprep.subr.mxu0 0.0
    %390 = vmatpush1.msra.mxu0 0.0
    %391 = vmatprep.subr.mxu0 0.0
    %392 = vmatpush1.msra.mxu0 0.0
    %393 = vmatprep.subr.mxu0 0.0
    %394 = vmatpush1.msra.mxu0 0.0
    %395 = vmatprep.subr.mxu0 0.0
    %396 = vmatpush1.msra.mxu0 0.0
    %397 = vmatprep.subr.mxu0 0.0
    %398 = vmatpush1.msra.mxu0 0.0
    %399 = vmatprep.subr.mxu0 0.0
    %400 = vmatpush1.msra.mxu0 0.0
    %401 = vmatprep.subr.mxu0 0.0
    %402 = vmatpush1.msra.mxu0 0.0
    %403 = vmatprep.subr.mxu0 0.0
    %404 = vmatpush1.msra.mxu0 0.0
    %405 = vmatprep.subr.mxu0 0.0
    %406 = vmatpush1.msra.mxu0 0.0
    %407 = vmatprep.subr.mxu0 0.0
    %408 = vmatpush1.msra.mxu0 0.0
    %409 = vmatprep.subr.mxu0 0.0
    %410 = vmatpush1.msra.mxu0 0.0
    %411 = vmatprep.subr.mxu0 0.0
    %412 = vmatpush1.msra.mxu0 0.0
    %413 = vmatprep.mubr.f32.mxu0 0.0
    %414 = vmatmul.mubr.f32.gmra.mrb[0].mxu0 %v344
    %v415 = vpop.f32.mrb[0].mxu0
    %v416 = vadd.f32 %v348, %v415
    %v417 = vpop.f32.mrb[0].mxu0
    %418 = vdwg.mxu0
    %v419 = vmax.f32 %v416, 0.0
    %v420 = vlaneseq
    %v421 = vshrl.u32 %v420, 7
    %v422 = vsub.s32 4, %v421
    %v423 = vrot.slane %v118, %v422
    %424 = vmatprep.subr.mxu0 0.0
    %425 = vmatpush1.msra.mxu0 %v102
    %426 = vmatprep.subr.mxu0 0.0
    %427 = vmatpush1.msra.mxu0 %v103
    %428 = vmatprep.subr.mxu0 0.0
    %429 = vmatpush1.msra.mxu0 %v104
    %430 = vmatprep.subr.mxu0 0.0
    %431 = vmatpush1.msra.mxu0 %v105
    %432 = vmatprep.subr.mxu0 0.0
    %433 = vmatpush1.msra.mxu0 %v106
    %434 = vmatprep.subr.mxu0 0.0
    %435 = vmatpush1.msra.mxu0 %v107
    %436 = vmatprep.subr.mxu0 0.0
    %437 = vmatpush1.msra.mxu0 %v108
    %438 = vmatprep.subr.mxu0 0.0
    %439 = vmatpush1.msra.mxu0 %v109
    %440 = vmatprep.subr.mxu0 0.0
    %441 = vmatpush1.msra.mxu0 %v110
    %442 = vmatprep.subr.mxu0 0.0
    %443 = vmatpush1.msra.mxu0 %v111
    %444 = vmatprep.subr.mxu0 0.0
    %445 = vmatpush1.msra.mxu0 %v112
    %446 = vmatprep.subr.mxu0 0.0
    %447 = vmatpush1.msra.mxu0 %v113
    %448 = vmatprep.subr.mxu0 0.0
    %449 = vmatpush1.msra.mxu0 %v114
    %450 = vmatprep.subr.mxu0 0.0
    %451 = vmatpush1.msra.mxu0 %v115
    %452 = vmatprep.subr.mxu0 0.0
    %453 = vmatpush1.msra.mxu0 %v116
    %454 = vmatprep.subr.mxu0 0.0
    %455 = vmatpush1.msra.mxu0 %v117
    %456 = vmatprep.subr.mxu0 0.0
    %457 = vmatpush1.msra.mxu0 0.0
    %458 = vmatprep.subr.mxu0 0.0
    %459 = vmatpush1.msra.mxu0 0.0
    %460 = vmatprep.subr.mxu0 0.0
    %461 = vmatpush1.msra.mxu0 0.0
    %462 = vmatprep.subr.mxu0 0.0
    %463 = vmatpush1.msra.mxu0 0.0
    %464 = vmatprep.subr.mxu0 0.0
    %465 = vmatpush1.msra.mxu0 0.0
    %466 = vmatprep.subr.mxu0 0.0
    %467 = vmatpush1.msra.mxu0 0.0
    %468 = vmatprep.subr.mxu0 0.0
    %469 = vmatpush1.msra.mxu0 0.0
    %470 = vmatprep.subr.mxu0 0.0
    %471 = vmatpush1.msra.mxu0 0.0
    %472 = vmatprep.subr.mxu0 0.0
    %473 = vmatpush1.msra.mxu0 0.0
    %474 = vmatprep.subr.mxu0 0.0
    %475 = vmatpush1.msra.mxu0 0.0
    %476 = vmatprep.subr.mxu0 0.0
    %477 = vmatpush1.msra.mxu0 0.0
    %478 = vmatprep.subr.mxu0 0.0
    %479 = vmatpush1.msra.mxu0 0.0
    %480 = vmatprep.subr.mxu0 0.0
    %481 = vmatpush1.msra.mxu0 0.0
    %482 = vmatprep.subr.mxu0 0.0
    %483 = vmatpush1.msra.mxu0 0.0
    %484 = vmatprep.subr.mxu0 0.0
    %485 = vmatpush1.msra.mxu0 0.0
    %486 = vmatprep.subr.mxu0 0.0
    %487 = vmatpush1.msra.mxu0 0.0
    %488 = vmatprep.mubr.f32.mxu0 0.0
    %489 = vmatmul.mubr.f32.gmra.mrb[0].mxu0 %v419
    %v490 = vpop.f32.mrb[0].mxu0
    %v491 = vadd.f32 %v423, %v490
    %v492 = vpop.f32.mrb[0].mxu0
    %493 = vdwg.mxu0
    %494 = vst [vmem:[#allocation7] sm:$0xff] %v491
    // Predicated region
    $region18: #{tpu_custom_call.1} parent=1 // pred_check
      _
    $region19: #{tpu_custom_call.1} parent=1 // pred_check_branch
      %496 = sbr.rel (0) target = $region21
    $region20: #{tpu_custom_call.1} parent=1 // pred_region
      %s498 = ssub.s32 128, 128
      %499 = vsyncadd [#allocation4], %s498
      %s501 = sshll.u32 [#allocation7], 4
      %s502 = int_to_ptr.vmem [resolvable:$true] %s501
      %504 = dma.vmem_to_hbm [thread:$0]  %s502, 128, %s2, [#allocation4]
    $region21: #{tpu_custom_call.1} parent=1 // pred_fallthru
      _
    // Predicated region
    $region22: #{tpu_custom_call.1} parent=1 // pred_check
      _
    $region23: #{tpu_custom_call.1} parent=1 // pred_check_branch
      %506 = sbr.rel (0) target = $region25
    $region24: #{tpu_custom_call.1} parent=1 // pred_region
      %507 = dma.done [#allocation4], 128
    $region25: #{tpu_custom_call.1} parent=1 // pred_fallthru
      _
    %508 = vsyncpa [#allocation3], 1
    %509 = vsyncpa [#allocation6], 1
    %510 = vsyncpa [#allocation4], 1

</llo_original>
